<compile_context>
chip_gen: v7x
topology: tpu7x:2x2x1
jax: 0.10.0
libtpu: 0.0.40
codegen_flags: <defaults>
</compile_context>

<pallas_src>
import functools

import jax
import jax.numpy as jnp
import numpy as np
from jax.experimental import pallas as pl
from jax.experimental.pallas import tpu as pltpu

_LANE = 128
_VMEM_BUDGET = 30 * 1024 * 1024  # stay under the 32 MiB scoped cap everywhere


def _latent_kernel(x_ref, wf_ref, bf_ref, wo_ref, bo_ref, mu_ref, sg_ref, *, cout):
    # x block: (1, Cin, t); weights are tiny and resident every step.
    x = x_ref[0]                                                   # (Cin, t)
    wf = wf_ref[...]
    wo = wo_ref[...]

    # Folded enc_in + enc_hidden[0], then enc_hidden[1] (ReLU).
    h = jnp.dot(wf, x, preferred_element_type=jnp.float32) + bf_ref[...]
    h = jnp.maximum(h, 0.0)                                        # (hidden, t)
    if h.dtype != wo.dtype:
        h = h.astype(wo.dtype)

    # Concatenated [enc_out_1 ; enc_out_2] followed by torch.minimum(., 10).
    out = jnp.dot(wo, h, preferred_element_type=jnp.float32) + bo_ref[...]
    out = jnp.minimum(out, 10.0)                                   # (2*cout, t)

    # Static sublane slices (cout is a multiple of 8) -> free vreg selection.
    mu_ref[0] = out[:cout].astype(mu_ref.dtype)
    sg_ref[0] = out[cout:].astype(sg_ref.dtype)


def _round_up(x, m):
    return ((x + m - 1) // m) * m


def _divisor_tile(hw, target, n_batch):
    """hw % 128 == 0. Pick lane tile = 128*m with m | (hw//128), 128*m <= target.
    Prefer >= 2 total programs (v7x megacore), then an even program count,
    then the biggest tile."""
    k = hw // _LANE
    cands = [m for m in range(1, k + 1)
             if k % m == 0 and _LANE * m <= max(target, _LANE)]
    if not cands:
        cands = [1]

    def score(m):
        progs = n_batch * (k // m)
        return (progs >= 2, progs % 2 == 0, m)

    return _LANE * max(cands, key=score)


def _vmem_bytes(cin, hidden, cout, t, in_b, out_b):
    x_tiles = 2 * cin * t * in_b                      # double-buffered input
    out_tiles = 2 * 2 * cout * t * out_b              # mu + sigma, double-buffered
    h_tmp = hidden * t * 4                            # f32 intermediate
    o_tmp = 2 * cout * t * 4                          # f32 fused-head result
    w_bytes = 2 * (hidden * cin + hidden + 2 * cout * hidden + 2 * cout) * in_b
    return x_tiles + out_tiles + h_tmp + o_tmp + w_bytes


def latent_layer_pallas(x_nchw, params, *, t_hw=16384,
                        compute_dtype=jnp.float32, out_dtype=jnp.float32):
    """x_nchw: (N, Cin, H, W). Returns (mu, sigma) in NCHW."""
    N, Cin, H, W = x_nchw.shape
    HW = H * W

    w_in, b_in, w_h, b_h, w_o1, b_o1, w_o2, b_o2 = params
    hidden = w_in.shape[1]
    cout = w_o1.shape[1]

    # --- offline parameter prep (runs once under jit, tiny) -----------------
    # Fold enc_in into enc_hidden[0]: no nonlinearity between them.
    w_fold = w_in @ w_h                               # (Cin, hidden)
    b_fold = b_in @ w_h + b_h                         # (1, hidden)
    # Concatenate the two output heads.
    w_out = jnp.concatenate([w_o1, w_o2], axis=1)     # (hidden, 2*cout)
    b_out = jnp.concatenate([b_o1, b_o2], axis=1)     # (1, 2*cout)
    # Transposed layout: weights (Cout, Cin), biases (Cout, 1).
    wf_t = w_fold.T.astype(compute_dtype)             # (hidden, Cin)
    wo_t = w_out.T.astype(compute_dtype)              # (2*cout, hidden)
    bf_t = b_fold.T.astype(jnp.float32)               # (hidden, 1)
    bo_t = b_out.T.astype(jnp.float32)                # (2*cout, 1)

    # --- input layout: free reshape of NCHW, no transpose -------------------
    x3 = x_nchw.reshape(N, Cin, HW).astype(compute_dtype)

    in_b = jnp.dtype(compute_dtype).itemsize
    out_b = jnp.dtype(out_dtype).itemsize

    hw128 = _round_up(HW, _LANE)
    slice_back = False
    if HW == hw128:
        # Common/clean path: lane tile is a divisor of HW -> no pad, no slice.
        target = t_hw
        t_eff = _divisor_tile(HW, target, N)
        while (_vmem_bytes(Cin, hidden, cout, t_eff, in_b, out_b) > _VMEM_BUDGET
               and t_eff > _LANE):
            target = t_eff // 2
            t_eff = _divisor_tile(HW, target, N)
        hw_out = HW
    elif _vmem_bytes(Cin, hidden, cout, HW, in_b, out_b) <= _VMEM_BUDGET:
        # Misaligned but small: single full-HW tile per batch (block == full
        # array dim is exempt from the 128-lane rule) -> still no pad/slice.
        t_eff = HW
        hw_out = HW
    else:
        # Rare fallback: pad to the next 128 multiple and slice afterwards.
        x3 = jnp.pad(x3, ((0, 0), (0, 0), (0, hw128 - HW)))
        t_eff = _divisor_tile(hw128, t_hw, N)
        hw_out = hw128
        slice_back = True

    est = _vmem_bytes(Cin, hidden, cout, t_eff, in_b, out_b)
    vmem_limit = int(min(max(int(est * 1.5) + (4 << 20), 16 << 20), 32 << 20))

    grid = (N, hw_out // t_eff)
    two_cout = 2 * cout
    full = lambda n, j: (0, 0)
    out_map = lambda n, j: (n, 0, j)

    mu3, sg3 = pl.pallas_call(
        functools.partial(_latent_kernel, cout=cout),
        out_shape=(
            jax.ShapeDtypeStruct((N, cout, hw_out), out_dtype),
            jax.ShapeDtypeStruct((N, cout, hw_out), out_dtype),
        ),
        grid_spec=pltpu.PrefetchScalarGridSpec(
            num_scalar_prefetch=0,
            grid=grid,
            in_specs=[
                pl.BlockSpec((1, Cin, t_eff), lambda n, j: (n, 0, j)),  # x tile
                pl.BlockSpec((hidden, Cin), full),                      # W_fold^T
                pl.BlockSpec((hidden, 1), full),                        # b_fold^T
                pl.BlockSpec((two_cout, hidden), full),                 # W_out^T
                pl.BlockSpec((two_cout, 1), full),                      # b_out^T
            ],
            out_specs=[
                pl.BlockSpec((1, cout, t_eff), out_map),                # mu
                pl.BlockSpec((1, cout, t_eff), out_map),                # sigma
            ],
        ),
        compiler_params=pltpu.CompilerParams(
            dimension_semantics=("parallel", "parallel"),
            vmem_limit_bytes=vmem_limit,
        ),
    )(x3, wf_t, bf_t, wo_t, bo_t)

    if slice_back:
        mu3 = mu3[:, :, :HW]
        sg3 = sg3[:, :, :HW]
    mu = mu3.reshape(N, cout, H, W)       # free reshape back to NCHW
    sigma = sg3.reshape(N, cout, H, W)
    return mu, sigma


def init_params(key, dm_dim, latent_dim_in, latent_dim_out, hidden_dim):
    """Deterministic synthetic parameters (conv weights stored transposed: (Cin, Cout))."""
    cin = dm_dim + latent_dim_in
    ks = jax.random.split(key, 8)

    def w(k, ci, co):
        lim = 1.0 / np.sqrt(ci)
        return jax.random.uniform(k, (ci, co), jnp.float32, -lim, lim)

    def b(k, ci, co):
        lim = 1.0 / np.sqrt(ci)
        return jax.random.uniform(k, (1, co), jnp.float32, -lim, lim)

    return (
        w(ks[0], cin, hidden_dim),            b(ks[1], cin, hidden_dim),
        w(ks[2], hidden_dim, hidden_dim),     b(ks[3], hidden_dim, hidden_dim),
        w(ks[4], hidden_dim, latent_dim_out), b(ks[5], hidden_dim, latent_dim_out),
        w(ks[6], hidden_dim, latent_dim_out), b(ks[7], hidden_dim, latent_dim_out),
    )


def latent_layer_ref(x_nchw, params):
    """Pure-JAX reference mirroring the PyTorch forward exactly (unfolded)."""
    w_in, b_in, w_h, b_h, w_o1, b_o1, w_o2, b_o2 = params
    N, Cin, H, W = x_nchw.shape
    x2d = jnp.transpose(x_nchw, (0, 2, 3, 1)).reshape(-1, Cin)
    h = x2d @ w_in + b_in
    h = jnp.maximum(h @ w_h + b_h, 0.0)          # enc_hidden[0] + enc_hidden[1] only
    mu = jnp.minimum(h @ w_o1 + b_o1, 10.0)
    sg = jnp.minimum(h @ w_o2 + b_o2, 10.0)
    cout = w_o1.shape[1]
    f = lambda y: jnp.transpose(y.reshape(N, H, W, cout), (0, 3, 1, 2))
    return f(mu), f(sg)


if __name__ == "__main__":
    # LatentLayer(dm_dim=4, latent_dim_in=4, latent_dim_out=32, hidden_dim=32)
    dm_dim, latent_dim_in, latent_dim_out, hidden_dim = 4, 4, 32, 32
    N, H, W = 2, 16, 8                        # HW = 128 -> clean (no-pad) path

    key = jax.random.PRNGKey(0)
    kx, kp = jax.random.split(key)
    x = jax.random.normal(kx, (N, dm_dim + latent_dim_in, H, W), jnp.float32)
    params = init_params(kp, dm_dim, latent_dim_in, latent_dim_out, hidden_dim)

    fn = jax.jit(functools.partial(latent_layer_pallas, t_hw=16384))
    mu, sigma = fn(x, params)
    jax.block_until_ready((mu, sigma))

    mu_ref, sigma_ref = latent_layer_ref(x, params)
    # Folding W_in@W_h changes fp32 rounding slightly; well within tolerance.
    np.testing.assert_allclose(np.asarray(mu), np.asarray(mu_ref), rtol=1e-5, atol=2e-5)
    np.testing.assert_allclose(np.asarray(sigma), np.asarray(sigma_ref), rtol=1e-5, atol=2e-5)

    assert mu.shape == (N, latent_dim_out, H, W) and sigma.shape == mu.shape
    print("KERNEL_OK")
</pallas_src>

<mosaic_0001>
module attributes {stable_mosaic.version = 11 : i64} {
  func.func @_latent_kernel(%arg0: i32, %arg1: i32, %arg2: memref<1x8x128xf32, #tpu.memory_space<vmem>>, %arg3: memref<32x8xf32, #tpu.memory_space<vmem>>, %arg4: memref<32x1xf32, #tpu.memory_space<vmem>>, %arg5: memref<64x32xf32, #tpu.memory_space<vmem>>, %arg6: memref<64x1xf32, #tpu.memory_space<vmem>>, %arg7: memref<1x32x128xf32, #tpu.memory_space<vmem>>, %arg8: memref<1x32x128xf32, #tpu.memory_space<vmem>>) attributes {dimension_semantics = [#tpu.dimension_semantics<parallel>, #tpu.dimension_semantics<parallel>], iteration_bounds = array<i64: 2, 1>, scalar_prefetch = 0 : i64, scratch_operands = 0 : i64, tpu.core_type = #tpu.core_type<tc>, window_params = [{transform_indices = @transform_0, window_bounds = array<i64: 1, 8, 128>}, {pipeline_mode = #tpu.pipeline_mode<synchronous>, transform_indices = @transform_1, window_bounds = array<i64: 32, 8>}, {pipeline_mode = #tpu.pipeline_mode<synchronous>, transform_indices = @transform_2, window_bounds = array<i64: 32, 1>}, {pipeline_mode = #tpu.pipeline_mode<synchronous>, transform_indices = @transform_3, window_bounds = array<i64: 64, 32>}, {pipeline_mode = #tpu.pipeline_mode<synchronous>, transform_indices = @transform_4, window_bounds = array<i64: 64, 1>}, {transform_indices = @transform_5, window_bounds = array<i64: 1, 32, 128>}, {transform_indices = @transform_6, window_bounds = array<i64: 1, 32, 128>}]} {
    %c0 = arith.constant 0 : index
    %c0_0 = arith.constant 0 : index
    %c0_1 = arith.constant 0 : index
    %0 = vector.load %arg2[%c0, %c0_0, %c0_1] : memref<1x8x128xf32, #tpu.memory_space<vmem>>, vector<1x8x128xf32>
    %1 = vector.shape_cast %0 : vector<1x8x128xf32> to vector<8x128xf32>
    %c0_2 = arith.constant 0 : index
    %c0_3 = arith.constant 0 : index
    %2 = vector.load %arg3[%c0_2, %c0_3] : memref<32x8xf32, #tpu.memory_space<vmem>>, vector<32x8xf32>
    %c0_4 = arith.constant 0 : index
    %c0_5 = arith.constant 0 : index
    %3 = vector.load %arg5[%c0_4, %c0_5] : memref<64x32xf32, #tpu.memory_space<vmem>>, vector<64x32xf32>
    %cst = arith.constant dense<0.000000e+00> : vector<32x128xf32>
    %4 = tpu.matmul %2, %1, %cst {dimension_numbers = #tpu.dot_dimension_numbers<[1], [0], [0], [1], [0, 0, 1, 1], [], []>} : vector<32x8xf32>, vector<8x128xf32>, vector<32x128xf32> -> vector<32x128xf32>
    %c0_6 = arith.constant 0 : index
    %c0_7 = arith.constant 0 : index
    %5 = vector.load %arg4[%c0_6, %c0_7] : memref<32x1xf32, #tpu.memory_space<vmem>>, vector<32x1xf32>
    %6 = vector.broadcast %5 : vector<32x1xf32> to vector<32x128xf32>
    %7 = arith.addf %4, %6 : vector<32x128xf32>
    %cst_8 = arith.constant 0.000000e+00 : f32
    %8 = vector.broadcast %cst_8 : f32 to vector<32x128xf32>
    %9 = arith.maximumf %7, %8 : vector<32x128xf32>
    %cst_9 = arith.constant dense<0.000000e+00> : vector<64x128xf32>
    %10 = tpu.matmul %3, %9, %cst_9 {dimension_numbers = #tpu.dot_dimension_numbers<[1], [0], [0], [1], [0, 0, 1, 1], [], []>} : vector<64x32xf32>, vector<32x128xf32>, vector<64x128xf32> -> vector<64x128xf32>
    %c0_10 = arith.constant 0 : index
    %c0_11 = arith.constant 0 : index
    %11 = vector.load %arg6[%c0_10, %c0_11] : memref<64x1xf32, #tpu.memory_space<vmem>>, vector<64x1xf32>
    %12 = vector.broadcast %11 : vector<64x1xf32> to vector<64x128xf32>
    %13 = arith.addf %10, %12 : vector<64x128xf32>
    %cst_12 = arith.constant 1.000000e+01 : f32
    %14 = vector.broadcast %cst_12 : f32 to vector<64x128xf32>
    %15 = arith.minimumf %13, %14 : vector<64x128xf32>
    %16 = vector.extract_strided_slice %15 {offsets = [0, 0], sizes = [32, 128], strides = [1, 1]} : vector<64x128xf32> to vector<32x128xf32>
    %c0_13 = arith.constant 0 : index
    %c0_14 = arith.constant 0 : index
    %c0_15 = arith.constant 0 : index
    %17 = vector.load %arg7[%c0_13, %c0_14, %c0_15] : memref<1x32x128xf32, #tpu.memory_space<vmem>>, vector<1x32x128xf32>
    %18 = vector.shape_cast %17 : vector<1x32x128xf32> to vector<32x128xf32>
    %19 = vector.shape_cast %16 : vector<32x128xf32> to vector<1x32x128xf32>
    tpu.vector_store %arg7[%c0_13, %c0_14, %c0_15], %19 {strides = array<i32>} : memref<1x32x128xf32, #tpu.memory_space<vmem>>, vector<1x32x128xf32>,
    %20 = vector.extract_strided_slice %15 {offsets = [32, 0], sizes = [32, 128], strides = [1, 1]} : vector<64x128xf32> to vector<32x128xf32>
    %c0_16 = arith.constant 0 : index
    %c0_17 = arith.constant 0 : index
    %c0_18 = arith.constant 0 : index
    %21 = vector.load %arg8[%c0_16, %c0_17, %c0_18] : memref<1x32x128xf32, #tpu.memory_space<vmem>>, vector<1x32x128xf32>
    %22 = vector.shape_cast %21 : vector<1x32x128xf32> to vector<32x128xf32>
    %23 = vector.shape_cast %20 : vector<32x128xf32> to vector<1x32x128xf32>
    tpu.vector_store %arg8[%c0_16, %c0_17, %c0_18], %23 {strides = array<i32>} : memref<1x32x128xf32, #tpu.memory_space<vmem>>, vector<1x32x128xf32>,
    return
  }
  func.func @transform_0(%arg0: i32, %arg1: i32) -> (i32, i32, i32) {
    %c0_i32 = arith.constant 0 : i32
    %c0_i32_0 = arith.constant 0 : i32
    return %arg0, %c0_i32, %arg1 : i32, i32, i32
  }
  func.func @transform_1(%arg0: i32, %arg1: i32) -> (i32, i32) {
    %c0_i32 = arith.constant 0 : i32
    %c0_i32_0 = arith.constant 0 : i32
    %c0_i32_1 = arith.constant 0 : i32
    return %c0_i32, %c0_i32_0 : i32, i32
  }
  func.func @transform_2(%arg0: i32, %arg1: i32) -> (i32, i32) {
    %c0_i32 = arith.constant 0 : i32
    %c0_i32_0 = arith.constant 0 : i32
    %c0_i32_1 = arith.constant 0 : i32
    return %c0_i32, %c0_i32_0 : i32, i32
  }
  func.func @transform_3(%arg0: i32, %arg1: i32) -> (i32, i32) {
    %c0_i32 = arith.constant 0 : i32
    %c0_i32_0 = arith.constant 0 : i32
    %c0_i32_1 = arith.constant 0 : i32
    return %c0_i32, %c0_i32_0 : i32, i32
  }
  func.func @transform_4(%arg0: i32, %arg1: i32) -> (i32, i32) {
    %c0_i32 = arith.constant 0 : i32
    %c0_i32_0 = arith.constant 0 : i32
    %c0_i32_1 = arith.constant 0 : i32
    return %c0_i32, %c0_i32_0 : i32, i32
  }
  func.func @transform_5(%arg0: i32, %arg1: i32) -> (i32, i32, i32) {
    %c0_i32 = arith.constant 0 : i32
    %c0_i32_0 = arith.constant 0 : i32
    return %arg0, %c0_i32, %arg1 : i32, i32, i32
  }
  func.func @transform_6(%arg0: i32, %arg1: i32) -> (i32, i32, i32) {
    %c0_i32 = arith.constant 0 : i32
    %c0_i32_0 = arith.constant 0 : i32
    return %arg0, %c0_i32, %arg1 : i32, i32, i32
  }
}

</mosaic_0001>

<llo_original>
// kernel: latent_layer_pallas.1
$region0: #{latent_layer_pallas.1}
  #allocation0 [shape = 'u32[]', space=smem, size = 0x4, offset = 0x4, fixed_abs, tag = 'smem constant byte address 0x4 - core index']
  #allocation1 [shape = 'u32[144,128]{1,0:T(1,128)}', space=vmem, size = 0x12000, scoped, tag = 'internal scratch']
  %s0 = inlined_call_operand.vmem [shape: f32[2,8,128], index: 0, kind: input, shape index: {}]
  %s1 = inlined_call_operand.vmem [shape: f32[32,8], index: 1, kind: input, shape index: {}]
  %s2 = inlined_call_operand.vmem [shape: f32[32,1], index: 2, kind: input, shape index: {}]
  %s3 = inlined_call_operand.vmem [shape: f32[64,32], index: 3, kind: input, shape index: {}]
  %s4 = inlined_call_operand.vmem [shape: f32[64,1], index: 4, kind: input, shape index: {}]
  %s5 = inlined_call_operand.vmem [shape: f32[2,32,128], index: 5, kind: output, shape index: {0}]
  %s6 = inlined_call_operand.vmem [shape: f32[2,32,128], index: 6, kind: output, shape index: {1}]
  %7 = xla_tuple %s5, %s6
  %s8 = sld [smem:[#allocation0]]
  $region61: #{latent_layer_pallas.1} parent=0
    _
  %s10 = ssub.s32 1, %s8
  %s11 = scalar_select 0, %s10, %s8
  loop: start=0, step=1, limit=4
  $region2: #{latent_layer_pallas.1} parent=0 // loop_pre_header
    _
  $region3: #{latent_layer_pallas.1} parent=0 // loop_header
    %s13 = sphi 0, %s17
    %p14 = scmp.ge.s32.totalorder %s13, 4
    %s20 = sphi 0, %s32
    %s21 = sphi 0, %s28
    %s22 = sphi 0, %s20
    %s23 = sphi 0, %s21
    %s24 = sphi 0, %s22
    %s25 = sphi 0, %s23
    %s37 = sphi 0, %s39
    %s40 = sphi 0, %s37
    %s41 = sphi 0, %s40
    %s57 = sphi 0, %s41
    %s61 = sphi 0, %s61
    %s63 = sphi 0, %s61
    %s64 = sphi 0, %s63
    %s78 = sphi 0, %s64
    %s82 = sphi 0, %s82
    %s84 = sphi 0, %s82
    %s85 = sphi 0, %s84
    %s99 = sphi 0, %s85
    %s103 = sphi 0, %s103
    %s105 = sphi 0, %s103
    %s106 = sphi 0, %s105
    %s120 = sphi 0, %s106
    %s124 = sphi 0, %s124
    %s126 = sphi 0, %s124
    %s127 = sphi 0, %s126
    %s141 = sphi 0, %s127
    %s149 = sphi 0, %s151
    %s152 = sphi 0, %s149
    %s153 = sphi 0, %s152
    %s169 = sphi 0, %s153
    %s177 = sphi 0, %s179
    %s180 = sphi 0, %s177
    %s181 = sphi 0, %s180
    %s197 = sphi 0, %s181
  $region4: #{latent_layer_pallas.1} parent=0 // loop_header_branch
    %16 = sbr.rel (%p14) target = $region8
  $region5: #{latent_layer_pallas.1} parent=0 // loop_body
    %s18 = ssub.s32 %s13, 1
    %s19 = ssub.s32 %s13, 2
    %s26 = sadd.s32 1, %s21
    %p27 = scmp.ge.s32.totalorder %s26, 1
    %s28 = scalar_select %p27, 0, %s26
    %s29 = sadd.s32 1, %s20
    %s30 = scalar_select %p27, %s29, %s20
    %p31 = scmp.ge.s32.totalorder %s30, 2
    %s32 = scalar_select %p31, 0, %s30
    %s33 = ssub.s32 %s20, %s32
    %s34 = ssub.s32 %s21, %s28
    %s35 = sor.u32 %s33, %s34
    %p36 = scmp.eq.s32.totalorder %s35, 0
    %s38 = sadd.s32 %s37, 1
    %s39 = scalar_select %p36, %s37, %s38
    %p42 = pneg %p36
    %p43 = scmp.eq.s32.totalorder %s13, 1
    %p44 = por %p42, %p43
    %p45 = scmp.ne.s32.totalorder %s37, %s40
    %p46 = scmp.eq.s32.totalorder %s13, 0
    %p47 = por %p45, %p46
    %p48 = scmp.ne.s32.totalorder %s37, %s40
    %p49 = scmp.eq.s32.totalorder %s18, 1
    %p50 = por %p48, %p49
    %p51 = scmp.ne.s32.totalorder %s40, %s41
    %p52 = scmp.eq.s32.totalorder %s18, 0
    %p53 = por %p51, %p52
    %p54 = scmp.ne.s32.totalorder %s40, %s41
    %p55 = scmp.eq.s32.totalorder %s19, 1
    %p56 = por %p54, %p55
    %p58 = scmp.ne.s32.totalorder %s41, %s57
    %p59 = scmp.eq.s32.totalorder %s19, 0
    %p60 = por %p58, %p59
    %s62 = sadd.s32 %s61, 1
    %p65 = scmp.eq.s32.totalorder %s13, 1
    %p66 = scmp.ne.s32.totalorder %s61, %s63
    %p67 = scmp.eq.s32.totalorder %s13, 0
    %p68 = por %p66, %p67
    %p69 = scmp.ne.s32.totalorder %s61, %s63
    %p70 = scmp.eq.s32.totalorder %s18, 1
    %p71 = por %p69, %p70
    %p72 = scmp.ne.s32.totalorder %s63, %s64
    %p73 = scmp.eq.s32.totalorder %s18, 0
    %p74 = por %p72, %p73
    %p75 = scmp.ne.s32.totalorder %s63, %s64
    %p76 = scmp.eq.s32.totalorder %s19, 1
    %p77 = por %p75, %p76
    %p79 = scmp.ne.s32.totalorder %s64, %s78
    %p80 = scmp.eq.s32.totalorder %s19, 0
    %p81 = por %p79, %p80
    %s83 = sadd.s32 %s82, 1
    %p86 = scmp.eq.s32.totalorder %s13, 1
    %p87 = scmp.ne.s32.totalorder %s82, %s84
    %p88 = scmp.eq.s32.totalorder %s13, 0
    %p89 = por %p87, %p88
    %p90 = scmp.ne.s32.totalorder %s82, %s84
    %p91 = scmp.eq.s32.totalorder %s18, 1
    %p92 = por %p90, %p91
    %p93 = scmp.ne.s32.totalorder %s84, %s85
    %p94 = scmp.eq.s32.totalorder %s18, 0
    %p95 = por %p93, %p94
    %p96 = scmp.ne.s32.totalorder %s84, %s85
    %p97 = scmp.eq.s32.totalorder %s19, 1
    %p98 = por %p96, %p97
    %p100 = scmp.ne.s32.totalorder %s85, %s99
    %p101 = scmp.eq.s32.totalorder %s19, 0
    %p102 = por %p100, %p101
    %s104 = sadd.s32 %s103, 1
    %p107 = scmp.eq.s32.totalorder %s13, 1
    %p108 = scmp.ne.s32.totalorder %s103, %s105
    %p109 = scmp.eq.s32.totalorder %s13, 0
    %p110 = por %p108, %p109
    %p111 = scmp.ne.s32.totalorder %s103, %s105
    %p112 = scmp.eq.s32.totalorder %s18, 1
    %p113 = por %p111, %p112
    %p114 = scmp.ne.s32.totalorder %s105, %s106
    %p115 = scmp.eq.s32.totalorder %s18, 0
    %p116 = por %p114, %p115
    %p117 = scmp.ne.s32.totalorder %s105, %s106
    %p118 = scmp.eq.s32.totalorder %s19, 1
    %p119 = por %p117, %p118
    %p121 = scmp.ne.s32.totalorder %s106, %s120
    %p122 = scmp.eq.s32.totalorder %s19, 0
    %p123 = por %p121, %p122
    %s125 = sadd.s32 %s124, 1
    %p128 = scmp.eq.s32.totalorder %s13, 1
    %p129 = scmp.ne.s32.totalorder %s124, %s126
    %p130 = scmp.eq.s32.totalorder %s13, 0
    %p131 = por %p129, %p130
    %p132 = scmp.ne.s32.totalorder %s124, %s126
    %p133 = scmp.eq.s32.totalorder %s18, 1
    %p134 = por %p132, %p133
    %p135 = scmp.ne.s32.totalorder %s126, %s127
    %p136 = scmp.eq.s32.totalorder %s18, 0
    %p137 = por %p135, %p136
    %p138 = scmp.ne.s32.totalorder %s126, %s127
    %p139 = scmp.eq.s32.totalorder %s19, 1
    %p140 = por %p138, %p139
    %p142 = scmp.ne.s32.totalorder %s127, %s141
    %p143 = scmp.eq.s32.totalorder %s19, 0
    %p144 = por %p142, %p143
    %s145 = ssub.s32 %s20, %s32
    %s146 = ssub.s32 %s21, %s28
    %s147 = sor.u32 %s145, %s146
    %p148 = scmp.eq.s32.totalorder %s147, 0
    %s150 = sadd.s32 %s149, 1
    %s151 = scalar_select %p148, %s149, %s150
    %p154 = pneg %p148
    %p155 = scmp.eq.s32.totalorder %s13, 1
    %p156 = por %p154, %p155
    %p157 = scmp.ne.s32.totalorder %s149, %s152
    %p158 = scmp.eq.s32.totalorder %s13, 0
    %p159 = por %p157, %p158
    %p160 = scmp.ne.s32.totalorder %s149, %s152
    %p161 = scmp.eq.s32.totalorder %s18, 1
    %p162 = por %p160, %p161
    %p163 = scmp.ne.s32.totalorder %s152, %s153
    %p164 = scmp.eq.s32.totalorder %s18, 0
    %p165 = por %p163, %p164
    %p166 = scmp.ne.s32.totalorder %s152, %s153
    %p167 = scmp.eq.s32.totalorder %s19, 1
    %p168 = por %p166, %p167
    %p170 = scmp.ne.s32.totalorder %s153, %s169
    %p171 = scmp.eq.s32.totalorder %s19, 0
    %p172 = por %p170, %p171
    %s173 = ssub.s32 %s20, %s32
    %s174 = ssub.s32 %s21, %s28
    %s175 = sor.u32 %s173, %s174
    %p176 = scmp.eq.s32.totalorder %s175, 0
    %s178 = sadd.s32 %s177, 1
    %s179 = scalar_select %p176, %s177, %s178
    %p182 = pneg %p176
    %p183 = scmp.eq.s32.totalorder %s13, 1
    %p184 = por %p182, %p183
    %p185 = scmp.ne.s32.totalorder %s177, %s180
    %p186 = scmp.eq.s32.totalorder %s13, 0
    %p187 = por %p185, %p186
    %p188 = scmp.ne.s32.totalorder %s177, %s180
    %p189 = scmp.eq.s32.totalorder %s18, 1
    %p190 = por %p188, %p189
    %p191 = scmp.ne.s32.totalorder %s180, %s181
    %p192 = scmp.eq.s32.totalorder %s18, 0
    %p193 = por %p191, %p192
    %p194 = scmp.ne.s32.totalorder %s180, %s181
    %p195 = scmp.eq.s32.totalorder %s19, 1
    %p196 = por %p194, %p195
    %p198 = scmp.ne.s32.totalorder %s181, %s197
    %p199 = scmp.eq.s32.totalorder %s19, 0
    %p200 = por %p198, %p199
    %p201 = scmp.le.s32.totalorder 1, %s13
    %p202 = scmp.lt.s32.totalorder %s13, 3
    %p203 = pnand %p201, %p202
    %p204 = pneg %p203
    // Predicated region
    $region9: #{latent_layer_pallas.1} parent=5 // pred_check
      _
    $region10: #{latent_layer_pallas.1} parent=5 // pred_check_branch
      %206 = sbr.rel (%p203) target = $region12
    $region11: #{latent_layer_pallas.1} parent=5 // pred_region
      %s207 = ssub.s32 %s13, 1
      // Predicated region
      $region13: #{latent_layer_pallas.1} parent=11 // pred_check
        %p208 = pneg %p74
      $region14: #{latent_layer_pallas.1} parent=11 // pred_check_branch
        %210 = sbr.rel (%p208) target = $region16
      $region15: #{latent_layer_pallas.1} parent=11 // pred_region
        _
      $region16: #{latent_layer_pallas.1} parent=11 // pred_fallthru
        _
      // Predicated region
      $region17: #{latent_layer_pallas.1} parent=11 // pred_check
        %p211 = pneg %p95
      $region18: #{latent_layer_pallas.1} parent=11 // pred_check_branch
        %213 = sbr.rel (%p211) target = $region20
      $region19: #{latent_layer_pallas.1} parent=11 // pred_region
        _
      $region20: #{latent_layer_pallas.1} parent=11 // pred_fallthru
        _
      // Predicated region
      $region21: #{latent_layer_pallas.1} parent=11 // pred_check
        %p214 = pneg %p116
      $region22: #{latent_layer_pallas.1} parent=11 // pred_check_branch
        %216 = sbr.rel (%p214) target = $region24
      $region23: #{latent_layer_pallas.1} parent=11 // pred_region
        _
      $region24: #{latent_layer_pallas.1} parent=11 // pred_fallthru
        _
      // Predicated region
      $region25: #{latent_layer_pallas.1} parent=11 // pred_check
        %p217 = pneg %p137
      $region26: #{latent_layer_pallas.1} parent=11 // pred_check_branch
        %219 = sbr.rel (%p217) target = $region28
      $region27: #{latent_layer_pallas.1} parent=11 // pred_region
        _
      $region28: #{latent_layer_pallas.1} parent=11 // pred_fallthru
        _
    $region12: #{latent_layer_pallas.1} parent=5 // pred_fallthru
      _
    %p220 = scmp.lt.s32.totalorder %s13, 2
    // Predicated region
    $region29: #{latent_layer_pallas.1} parent=5 // pred_check
      %p221 = pneg %p220
    $region30: #{latent_layer_pallas.1} parent=5 // pred_check_branch
      %223 = sbr.rel (%p221) target = $region32
    $region31: #{latent_layer_pallas.1} parent=5 // pred_region
      // Predicated region
      $region33: #{latent_layer_pallas.1} parent=31 // pred_check
        %p224 = pneg %p47
      $region34: #{latent_layer_pallas.1} parent=31 // pred_check_branch
        %226 = sbr.rel (%p224) target = $region36
      $region35: #{latent_layer_pallas.1} parent=31 // pred_region
        %p227 = scmp.lt.s32.totalorder %s20, 1
        %s228 = scalar_select %p227, %s20, 1
        %p229 = scmp.lt.s32.totalorder %s21, 0
        %s230 = scalar_select %p229, %s21, 0
        %s231 = sadd.s32 %s230, %s228
        %s232 = smul.addr %s231, 8
        %s233 = scalar_lea.vmem %s0, %s232
      $region36: #{latent_layer_pallas.1} parent=31 // pred_fallthru
        _
    $region32: #{latent_layer_pallas.1} parent=5 // pred_fallthru
      _
    %p234 = scmp.le.s32.totalorder 1, %s13
    %p235 = scmp.lt.s32.totalorder %s13, 3
    %p236 = pnand %p234, %p235
    %p237 = pneg %p236
    // Predicated region
    $region37: #{latent_layer_pallas.1} parent=5 // pred_check
      _
    $region38: #{latent_layer_pallas.1} parent=5 // pred_check_branch
      %239 = sbr.rel (%p236) target = $region40
    $region39: #{latent_layer_pallas.1} parent=5 // pred_region
      %s240 = ssub.s32 %s13, 1
      %p241 = scmp.lt.s32.totalorder %s22, 1
      %s242 = scalar_select %p241, %s22, 1
      %p243 = scmp.lt.s32.totalorder %s23, 0
      %s244 = scalar_select %p243, %s23, 0
      %s245 = sadd.s32 %s244, %s242
      %s246 = smul.addr %s245, 8
      %s247 = scalar_lea.vmem %s0, %s246
      %p248 = pneg %p53
      %p249 = pneg %p50
      %p250 = pneg %p74
      %p251 = pneg %p71
      %p252 = pneg %p95
      %p253 = pneg %p92
      %p254 = pneg %p116
      %p255 = pneg %p113
      %p256 = pneg %p137
      %p257 = pneg %p134
      %p258 = pneg %p165
      %p259 = pneg %p162
      %p260 = scmp.lt.s32.totalorder %s22, 1
      %s261 = scalar_select %p260, %s22, 1
      %p262 = scmp.lt.s32.totalorder %s23, 0
      %s263 = scalar_select %p262, %s23, 0
      %s264 = smul.addr %s261, 4
      %s265 = sadd.s32 %s263, %s264
      %s266 = smul.addr %s265, 8
      %s267 = scalar_lea.vmem %s5, %s266
      %p268 = pneg %p193
      %p269 = pneg %p190
      %p270 = scmp.lt.s32.totalorder %s22, 1
      %s271 = scalar_select %p270, %s22, 1
      %p272 = scmp.lt.s32.totalorder %s23, 0
      %s273 = scalar_select %p272, %s23, 0
      %s274 = smul.addr %s271, 4
      %s275 = sadd.s32 %s273, %s274
      %s276 = smul.addr %s275, 8
      %s277 = scalar_lea.vmem %s6, %s276
      %p278 = scmp.lt.s32.totalorder %s22, 1
      %s279 = scalar_select %p278, %s22, 1
      %p280 = scmp.lt.s32.totalorder %s23, 0
      %s281 = scalar_select %p280, %s23, 0
      %s282 = sadd.s32 %s281, %s279
      %s283 = smul.addr %s282, 8
      %s284 = scalar_lea.vmem %s0, %s283
      %p285 = scmp.lt.s32.totalorder %s22, 1
      %s286 = scalar_select %p285, %s22, 1
      %p287 = scmp.lt.s32.totalorder %s23, 0
      %s288 = scalar_select %p287, %s23, 0
      %s289 = smul.addr %s286, 4
      %s290 = sadd.s32 %s288, %s289
      %s291 = smul.addr %s290, 8
      %s292 = scalar_lea.vmem %s5, %s291
      %p293 = scmp.lt.s32.totalorder %s22, 1
      %s294 = scalar_select %p293, %s22, 1
      %p295 = scmp.lt.s32.totalorder %s23, 0
      %s296 = scalar_select %p295, %s23, 0
      %s297 = smul.addr %s294, 4
      %s298 = sadd.s32 %s296, %s297
      %s299 = smul.addr %s298, 8
      %s300 = scalar_lea.vmem %s6, %s299
      %v301 = vld [vmem:[%s284] sm:$0xff]
      %v302 = vld [vmem:[%s1] sm:$0xff]
      %v303 = vld [vmem:[%s1 + $0x8] sm:$0xff]
      %v304 = vld [vmem:[%s1 + $0x10] sm:$0xff]
      %v305 = vld [vmem:[%s1 + $0x18] sm:$0xff]
      %v306 = vld [vmem:[%s3] sm:$0xff]
      %v307 = vld [vmem:[%s3 + $0x8] sm:$0xff]
      %v308 = vld [vmem:[%s3 + $0x10] sm:$0xff]
      %v309 = vld [vmem:[%s3 + $0x18] sm:$0xff]
      %v310 = vld [vmem:[%s3 + $0x20] sm:$0xff]
      %v311 = vld [vmem:[%s3 + $0x28] sm:$0xff]
      %v312 = vld [vmem:[%s3 + $0x30] sm:$0xff]
      %v313 = vld [vmem:[%s3 + $0x38] sm:$0xff]
      %v314 = vld [vmem:[%s2] sm:$0xff]
      %v315 = vld [vmem:[%s2 + $0x8] sm:$0xff]
      %v316 = vld [vmem:[%s2 + $0x10] sm:$0xff]
      %v317 = vld [vmem:[%s2 + $0x18] sm:$0xff]
      %319 = vset.pattern.permute.xlu0 0
      %320 = vperm.xlu0 %319, %v314
      %v321 = vpop.permute.xlu0 %320
      %324 = vset.pattern.permute.xlu0 0
      %325 = vperm.xlu0 %324, %v315
      %v326 = vpop.permute.xlu0 %325
      %329 = vset.pattern.permute.xlu0 0
      %330 = vperm.xlu0 %329, %v316
      %v331 = vpop.permute.xlu0 %330
      %334 = vset.pattern.permute.xlu0 0
      %335 = vperm.xlu0 %334, %v317
      %v336 = vpop.permute.xlu0 %335
      %vm338 = vcmask 64512
      %v340 = vsel %vm338, %v302, 0
      %v343 = vsel %vm338, %v303, 0
      %v346 = vsel %vm338, %v304, 0
      %v349 = vsel %vm338, %v305, 0
      %351 = vmatprep.subr.mxu0 0.0
      %352 = vmatpush1.msra.mxu0 %v301
      %353 = vmatprep.subr.mxu0 0.0
      %354 = vmatpush1.msra.mxu0 0.0
      %355 = vmatprep.subr.mxu0 0.0
      %356 = vmatpush1.msra.mxu0 0.0
      %357 = vmatprep.subr.mxu0 0.0
      %358 = vmatpush1.msra.mxu0 0.0
      %359 = vmatprep.subr.mxu0 0.0
      %360 = vmatpush1.msra.mxu0 0.0
      %361 = vmatprep.subr.mxu0 0.0
      %362 = vmatpush1.msra.mxu0 0.0
      %363 = vmatprep.subr.mxu0 0.0
      %364 = vmatpush1.msra.mxu0 0.0
      %365 = vmatprep.subr.mxu0 0.0
      %366 = vmatpush1.msra.mxu0 0.0
      %367 = vmatprep.subr.mxu0 0.0
      %368 = vmatpush1.msra.mxu0 0.0
      %369 = vmatprep.subr.mxu0 0.0
      %370 = vmatpush1.msra.mxu0 0.0
      %371 = vmatprep.subr.mxu0 0.0
      %372 = vmatpush1.msra.mxu0 0.0
      %373 = vmatprep.subr.mxu0 0.0
      %374 = vmatpush1.msra.mxu0 0.0
      %375 = vmatprep.subr.mxu0 0.0
      %376 = vmatpush1.msra.mxu0 0.0
      %377 = vmatprep.subr.mxu0 0.0
      %378 = vmatpush1.msra.mxu0 0.0
      %379 = vmatprep.subr.mxu0 0.0
      %380 = vmatpush1.msra.mxu0 0.0
      %381 = vmatprep.subr.mxu0 0.0
      %382 = vmatpush1.msra.mxu0 0.0
      %383 = vmatprep.subr.mxu0 0.0
      %384 = vmatpush1.msra.mxu0 0.0
      %385 = vmatprep.subr.mxu0 0.0
      %386 = vmatpush1.msra.mxu0 0.0
      %387 = vmatprep.subr.mxu0 0.0
      %388 = vmatpush1.msra.mxu0 0.0
      %389 = vmatprep.subr.mxu0 0.0
      %390 = vmatpush1.msra.mxu0 0.0
      %391 = vmatprep.subr.mxu0 0.0
      %392 = vmatpush1.msra.mxu0 0.0
      %393 = vmatprep.subr.mxu0 0.0
      %394 = vmatpush1.msra.mxu0 0.0
      %395 = vmatprep.subr.mxu0 0.0
      %396 = vmatpush1.msra.mxu0 0.0
      %397 = vmatprep.subr.mxu0 0.0
      %398 = vmatpush1.msra.mxu0 0.0
      %399 = vmatprep.subr.mxu0 0.0
      %400 = vmatpush1.msra.mxu0 0.0
      %401 = vmatprep.subr.mxu0 0.0
      %402 = vmatpush1.msra.mxu0 0.0
      %403 = vmatprep.subr.mxu0 0.0
      %404 = vmatpush1.msra.mxu0 0.0
      %405 = vmatprep.subr.mxu0 0.0
      %406 = vmatpush1.msra.mxu0 0.0
      %407 = vmatprep.subr.mxu0 0.0
      %408 = vmatpush1.msra.mxu0 0.0
      %409 = vmatprep.subr.mxu0 0.0
      %410 = vmatpush1.msra.mxu0 0.0
      %411 = vmatprep.subr.mxu0 0.0
      %412 = vmatpush1.msra.mxu0 0.0
      %413 = vmatprep.subr.mxu0 0.0
      %414 = vmatpush1.msra.mxu0 0.0
      %415 = vmatprep.mubr.f32.mxu0 0.0
      %416 = vmatmul.mubr.f32.gmra.mrb[0].mxu0 %v340
      %v417 = vpop.f32.mrb[0].mxu0
      %v418 = vadd.f32 %v321, %v417
      %v419 = vpop.f32.mrb[0].mxu0
      %420 = vmatprep.mubr.f32.mxu0 0.0
      %421 = vmatmul.mubr.f32.gmra.mrb[0].mxu0 %v343
      %v422 = vpop.f32.mrb[0].mxu0
      %v423 = vadd.f32 %v326, %v422
      %v424 = vpop.f32.mrb[0].mxu0
      %425 = vmatprep.mubr.f32.mxu0 0.0
      %426 = vmatmul.mubr.f32.gmra.mrb[0].mxu0 %v346
      %v427 = vpop.f32.mrb[0].mxu0
      %v428 = vadd.f32 %v331, %v427
      %v429 = vpop.f32.mrb[0].mxu0
      %430 = vmatprep.mubr.f32.mxu0 0.0
      %431 = vmatmul.mubr.f32.gmra.mrb[0].mxu0 %v349
      %v432 = vpop.f32.mrb[0].mxu0
      %v433 = vadd.f32 %v336, %v432
      %v434 = vpop.f32.mrb[0].mxu0
      %435 = vdwg.mxu0
      %v436 = vmax.f32 %v418, 0.0
      %v437 = vmax.f32 %v423, 0.0
      %v438 = vmax.f32 %v428, 0.0
      %v439 = vmax.f32 %v433, 0.0
      %v440 = vld [vmem:[%s4] sm:$0xff]
      %v441 = vld [vmem:[%s4 + $0x8] sm:$0xff]
      %v442 = vld [vmem:[%s4 + $0x10] sm:$0xff]
      %v443 = vld [vmem:[%s4 + $0x18] sm:$0xff]
      %v444 = vld [vmem:[%s4 + $0x20] sm:$0xff]
      %v445 = vld [vmem:[%s4 + $0x28] sm:$0xff]
      %v446 = vld [vmem:[%s4 + $0x30] sm:$0xff]
      %v447 = vld [vmem:[%s4 + $0x38] sm:$0xff]
      %449 = vset.pattern.permute.xlu0 0
      %450 = vperm.xlu0 %449, %v440
      %v451 = vpop.permute.xlu0 %450
      %454 = vset.pattern.permute.xlu0 0
      %455 = vperm.xlu0 %454, %v441
      %v456 = vpop.permute.xlu0 %455
      %459 = vset.pattern.permute.xlu0 0
      %460 = vperm.xlu0 %459, %v442
      %v461 = vpop.permute.xlu0 %460
      %464 = vset.pattern.permute.xlu0 0
      %465 = vperm.xlu0 %464, %v443
      %v466 = vpop.permute.xlu0 %465
      %469 = vset.pattern.permute.xlu0 0
      %470 = vperm.xlu0 %469, %v444
      %v471 = vpop.permute.xlu0 %470
      %474 = vset.pattern.permute.xlu0 0
      %475 = vperm.xlu0 %474, %v445
      %v476 = vpop.permute.xlu0 %475
      %479 = vset.pattern.permute.xlu0 0
      %480 = vperm.xlu0 %479, %v446
      %v481 = vpop.permute.xlu0 %480
      %484 = vset.pattern.permute.xlu0 0
      %485 = vperm.xlu0 %484, %v447
      %v486 = vpop.permute.xlu0 %485
      %vm488 = vcmask 261120
      %v490 = vsel %vm488, %v306, 0
      %v493 = vsel %vm488, %v307, 0
      %v496 = vsel %vm488, %v308, 0
      %v499 = vsel %vm488, %v309, 0
      %v502 = vsel %vm488, %v310, 0
      %v505 = vsel %vm488, %v311, 0
      %v508 = vsel %vm488, %v312, 0
      %v511 = vsel %vm488, %v313, 0
      %513 = vmatprep.subr.mxu0 0.0
      %514 = vmatpush1.msra.mxu0 %v436
      %515 = vmatprep.subr.mxu0 0.0
      %516 = vmatpush1.msra.mxu0 %v437
      %517 = vmatprep.subr.mxu0 0.0
      %518 = vmatpush1.msra.mxu0 %v438
      %519 = vmatprep.subr.mxu0 0.0
      %520 = vmatpush1.msra.mxu0 %v439
      %521 = vmatprep.subr.mxu0 0.0
      %522 = vmatpush1.msra.mxu0 0.0
      %523 = vmatprep.subr.mxu0 0.0
      %524 = vmatpush1.msra.mxu0 0.0
      %525 = vmatprep.subr.mxu0 0.0
      %526 = vmatpush1.msra.mxu0 0.0
      %527 = vmatprep.subr.mxu0 0.0
      %528 = vmatpush1.msra.mxu0 0.0
      %529 = vmatprep.subr.mxu0 0.0
      %530 = vmatpush1.msra.mxu0 0.0
      %531 = vmatprep.subr.mxu0 0.0
      %532 = vmatpush1.msra.mxu0 0.0
      %533 = vmatprep.subr.mxu0 0.0
      %534 = vmatpush1.msra.mxu0 0.0
      %535 = vmatprep.subr.mxu0 0.0
      %536 = vmatpush1.msra.mxu0 0.0
      %537 = vmatprep.subr.mxu0 0.0
      %538 = vmatpush1.msra.mxu0 0.0
      %539 = vmatprep.subr.mxu0 0.0
      %540 = vmatpush1.msra.mxu0 0.0
      %541 = vmatprep.subr.mxu0 0.0
      %542 = vmatpush1.msra.mxu0 0.0
      %543 = vmatprep.subr.mxu0 0.0
      %544 = vmatpush1.msra.mxu0 0.0
      %545 = vmatprep.subr.mxu0 0.0
      %546 = vmatpush1.msra.mxu0 0.0
      %547 = vmatprep.subr.mxu0 0.0
      %548 = vmatpush1.msra.mxu0 0.0
      %549 = vmatprep.subr.mxu0 0.0
      %550 = vmatpush1.msra.mxu0 0.0
      %551 = vmatprep.subr.mxu0 0.0
      %552 = vmatpush1.msra.mxu0 0.0
      %553 = vmatprep.subr.mxu0 0.0
      %554 = vmatpush1.msra.mxu0 0.0
      %555 = vmatprep.subr.mxu0 0.0
      %556 = vmatpush1.msra.mxu0 0.0
      %557 = vmatprep.subr.mxu0 0.0
      %558 = vmatpush1.msra.mxu0 0.0
      %559 = vmatprep.subr.mxu0 0.0
      %560 = vmatpush1.msra.mxu0 0.0
      %561 = vmatprep.subr.mxu0 0.0
      %562 = vmatpush1.msra.mxu0 0.0
      %563 = vmatprep.subr.mxu0 0.0
      %564 = vmatpush1.msra.mxu0 0.0
      %565 = vmatprep.subr.mxu0 0.0
      %566 = vmatpush1.msra.mxu0 0.0
      %567 = vmatprep.subr.mxu0 0.0
      %568 = vmatpush1.msra.mxu0 0.0
      %569 = vmatprep.subr.mxu0 0.0
      %570 = vmatpush1.msra.mxu0 0.0
      %571 = vmatprep.subr.mxu0 0.0
      %572 = vmatpush1.msra.mxu0 0.0
      %573 = vmatprep.subr.mxu0 0.0
      %574 = vmatpush1.msra.mxu0 0.0
      %575 = vmatprep.subr.mxu0 0.0
      %576 = vmatpush1.msra.mxu0 0.0
      %577 = vmatprep.mubr.f32.mxu0 0.0
      %578 = vmatmul.mubr.f32.gmra.mrb[0].mxu0 %v490
      %v579 = vpop.f32.mrb[0].mxu0
      %v580 = vadd.f32 %v451, %v579
      %v581 = vpop.f32.mrb[0].mxu0
      %582 = vmatprep.mubr.f32.mxu0 0.0
      %583 = vmatmul.mubr.f32.gmra.mrb[0].mxu0 %v493
      %v584 = vpop.f32.mrb[0].mxu0
      %v585 = vadd.f32 %v456, %v584
      %v586 = vpop.f32.mrb[0].mxu0
      %587 = vmatprep.mubr.f32.mxu0 0.0
      %588 = vmatmul.mubr.f32.gmra.mrb[0].mxu0 %v496
      %v589 = vpop.f32.mrb[0].mxu0
      %v590 = vadd.f32 %v461, %v589
      %v591 = vpop.f32.mrb[0].mxu0
      %592 = vmatprep.mubr.f32.mxu0 0.0
      %593 = vmatmul.mubr.f32.gmra.mrb[0].mxu0 %v499
      %v594 = vpop.f32.mrb[0].mxu0
      %v595 = vadd.f32 %v466, %v594
      %v596 = vpop.f32.mrb[0].mxu0
      %597 = vmatprep.mubr.f32.mxu0 0.0
      %598 = vmatmul.mubr.f32.gmra.mrb[0].mxu0 %v502
      %v599 = vpop.f32.mrb[0].mxu0
      %v600 = vadd.f32 %v471, %v599
      %v601 = vpop.f32.mrb[0].mxu0
      %602 = vmatprep.mubr.f32.mxu0 0.0
      %603 = vmatmul.mubr.f32.gmra.mrb[0].mxu0 %v505
      %v604 = vpop.f32.mrb[0].mxu0
      %v605 = vadd.f32 %v476, %v604
      %v606 = vpop.f32.mrb[0].mxu0
      %607 = vmatprep.mubr.f32.mxu0 0.0
      %608 = vmatmul.mubr.f32.gmra.mrb[0].mxu0 %v508
      %v609 = vpop.f32.mrb[0].mxu0
      %v610 = vadd.f32 %v481, %v609
      %v611 = vpop.f32.mrb[0].mxu0
      %612 = vmatprep.mubr.f32.mxu0 0.0
      %613 = vmatmul.mubr.f32.gmra.mrb[0].mxu0 %v511
      %v614 = vpop.f32.mrb[0].mxu0
      %v615 = vadd.f32 %v486, %v614
      %v616 = vpop.f32.mrb[0].mxu0
      %617 = vdwg.mxu0
      %v618 = vmin.f32 %v580, 10.0
      %v619 = vmin.f32 %v585, 10.0
      %v620 = vmin.f32 %v590, 10.0
      %v621 = vmin.f32 %v595, 10.0
      %v622 = vmin.f32 %v600, 10.0
      %v623 = vmin.f32 %v605, 10.0
      %v624 = vmin.f32 %v610, 10.0
      %v625 = vmin.f32 %v615, 10.0
      %626 = vst [vmem:[%s292] sm:$0xff] %v618
      %627 = vst [vmem:[%s292 + $0x8] sm:$0xff] %v619
      %628 = vst [vmem:[%s292 + $0x10] sm:$0xff] %v620
      %629 = vst [vmem:[%s292 + $0x18] sm:$0xff] %v621
      %630 = vst [vmem:[%s300] sm:$0xff] %v622
      %631 = vst [vmem:[%s300 + $0x8] sm:$0xff] %v623
      %632 = vst [vmem:[%s300 + $0x10] sm:$0xff] %v624
      %633 = vst [vmem:[%s300 + $0x18] sm:$0xff] %v625
      %p634 = scmp.lt.s32.totalorder %s22, 1
      %s635 = scalar_select %p634, %s22, 1
      %p636 = scmp.lt.s32.totalorder %s23, 0
      %s637 = scalar_select %p636, %s23, 0
      %s638 = smul.addr %s635, 4
      %s639 = sadd.s32 %s637, %s638
      %s640 = smul.addr %s639, 8
      %s641 = scalar_lea.vmem %s5, %s640
      %p642 = scmp.lt.s32.totalorder %s22, 1
      %s643 = scalar_select %p642, %s22, 1
      %p644 = scmp.lt.s32.totalorder %s23, 0
      %s645 = scalar_select %p644, %s23, 0
      %s646 = smul.addr %s643, 4
      %s647 = sadd.s32 %s645, %s646
      %s648 = smul.addr %s647, 8
      %s649 = scalar_lea.vmem %s6, %s648
      // Predicated region
      $region41: #{latent_layer_pallas.1} parent=39 // pred_check
        %p650 = pneg %p162
      $region42: #{latent_layer_pallas.1} parent=39 // pred_check_branch
        %652 = sbr.rel (%p650) target = $region44
      $region43: #{latent_layer_pallas.1} parent=39 // pred_region
        _
      $region44: #{latent_layer_pallas.1} parent=39 // pred_fallthru
        _
      // Predicated region
      $region45: #{latent_layer_pallas.1} parent=39 // pred_check
        %p653 = pneg %p190
      $region46: #{latent_layer_pallas.1} parent=39 // pred_check_branch
        %655 = sbr.rel (%p653) target = $region48
      $region47: #{latent_layer_pallas.1} parent=39 // pred_region
        _
      $region48: #{latent_layer_pallas.1} parent=39 // pred_fallthru
        _
    $region40: #{latent_layer_pallas.1} parent=5 // pred_fallthru
      _
    %p656 = scmp.le.s32.totalorder 2, %s13
    // Predicated region
    $region49: #{latent_layer_pallas.1} parent=5 // pred_check
      %p657 = pneg %p656
    $region50: #{latent_layer_pallas.1} parent=5 // pred_check_branch
      %659 = sbr.rel (%p657) target = $region52
    $region51: #{latent_layer_pallas.1} parent=5 // pred_region
      %s660 = ssub.s32 %s13, 2
      // Predicated region
      $region53: #{latent_layer_pallas.1} parent=51 // pred_check
        %p661 = pneg %p168
      $region54: #{latent_layer_pallas.1} parent=51 // pred_check_branch
        %663 = sbr.rel (%p661) target = $region56
      $region55: #{latent_layer_pallas.1} parent=51 // pred_region
        %p664 = scmp.lt.s32.totalorder %s24, 1
        %s665 = scalar_select %p664, %s24, 1
        %p666 = scmp.lt.s32.totalorder %s25, 0
        %s667 = scalar_select %p666, %s25, 0
        %s668 = smul.addr %s665, 4
        %s669 = sadd.s32 %s667, %s668
        %s670 = smul.addr %s669, 8
        %s671 = scalar_lea.vmem %s5, %s670
      $region56: #{latent_layer_pallas.1} parent=51 // pred_fallthru
        _
      // Predicated region
      $region57: #{latent_layer_pallas.1} parent=51 // pred_check
        %p672 = pneg %p196
      $region58: #{latent_layer_pallas.1} parent=51 // pred_check_branch
        %674 = sbr.rel (%p672) target = $region60
      $region59: #{latent_layer_pallas.1} parent=51 // pred_region
        %p675 = scmp.lt.s32.totalorder %s24, 1
        %s676 = scalar_select %p675, %s24, 1
        %p677 = scmp.lt.s32.totalorder %s25, 0
        %s678 = scalar_select %p677, %s25, 0
        %s679 = smul.addr %s676, 4
        %s680 = sadd.s32 %s678, %s679
        %s681 = smul.addr %s680, 8
        %s682 = scalar_lea.vmem %s6, %s681
      $region60: #{latent_layer_pallas.1} parent=51 // pred_fallthru
        _
    $region52: #{latent_layer_pallas.1} parent=5 // pred_fallthru
      _
  $region6: #{latent_layer_pallas.1} parent=0 // loop_footer
    %s17 = sadd.s32 1, %s13
  $region7: #{latent_layer_pallas.1} parent=0 // loop_footer_branch
    %12 = sbr.rel target = $region3
  $region8: #{latent_layer_pallas.1} parent=0 // loop_exit
    _

</llo_original>
